<compile_context>
chip_gen: v5e
topology: v5e:2x2
jax: 0.10.0
libtpu: 0.0.40
codegen_flags: <defaults>
</compile_context>

<pallas_src>
import jax
import jax.numpy as jnp
from jax import lax
from jax.experimental import pallas as pl
from jax.experimental.pallas import tpu as pltpu


def _round_up(x: int, m: int) -> int:
    return (x + m - 1) // m * m


def _vmem_budget_bytes() -> int:
    """Per-chip VMEM budget with headroom (v5e/v6e ~96 MiB, v7x ~48 MiB)."""
    cap = 64 * 1024 * 1024  # conservative fallback (v7x-sized)
    try:
        info_fn = getattr(pltpu, "get_tpu_info", None)
        if info_fn is not None:
            cap = int(info_fn().vmem_capacity_bytes)
    except Exception:
        pass
    # Leave ~25% headroom for compiler scratch / pipeline buffers; never ask
    # for more than ~100 MiB even on 128 MiB parts.
    return max(16 * 1024 * 1024, min(cap * 3 // 4, 100 * 1024 * 1024))


# ---------------------------------------------------------------------------
# Path A: VMEM-resident table -> one-hot @ table on the MXU
# ---------------------------------------------------------------------------
def _onehot_matmul_kernel(idx_ref, emb_ref, out_ref):
    # idx_ref: (TN, 1) int32  -- per-tile indices (tiny VMEM input)
    # emb_ref: (V, D)  float  -- full table, block-invariant across grid steps
    # out_ref: (TN, D) float
    tn = out_ref.shape[0]
    v = emb_ref.shape[0]
    ids = idx_ref[...]                                          # (TN, 1)
    col = jax.lax.broadcasted_iota(jnp.int32, (tn, v), 1)       # (TN, V)
    onehot = (ids == col).astype(emb_ref.dtype)                 # exact 0/1 mask
    out_ref[...] = jnp.dot(
        onehot, emb_ref[...], preferred_element_type=jnp.float32
    ).astype(out_ref.dtype)


def _lookup_onehot(idx_flat_padded, emb_table, tn, vmem_limit):
    n_pad = idx_flat_padded.shape[0]
    v, d = emb_table.shape
    esize = jnp.dtype(emb_table.dtype).itemsize
    n_steps = n_pad // tn
    idx_2d = idx_flat_padded.reshape(n_pad, 1)

    cost = pl.CostEstimate(
        flops=2 * n_pad * v * d,
        transcendentals=0,
        bytes_accessed=v * d * esize + n_pad * d * esize + n_pad * 4,
    )

    return pl.pallas_call(
        _onehot_matmul_kernel,
        out_shape=jax.ShapeDtypeStruct((n_pad, d), emb_table.dtype),
        grid_spec=pltpu.PrefetchScalarGridSpec(
            num_scalar_prefetch=0,
            grid=(n_steps,),
            in_specs=[
                pl.BlockSpec((tn, 1), lambda i: (i, 0)),   # tiny index tile
                pl.BlockSpec((v, d), lambda i: (0, 0)),    # full table, resident
            ],
            out_specs=pl.BlockSpec((tn, d), lambda i: (i, 0)),
        ),
        compiler_params=pltpu.CompilerParams(
            dimension_semantics=("parallel",),
            vmem_limit_bytes=int(vmem_limit),
        ),
        cost_estimate=cost,
    )(idx_2d, emb_table)


# ---------------------------------------------------------------------------
# Path B: large vocabulary -> scalar-prefetch driven DMA row gather from HBM
# ---------------------------------------------------------------------------
def _dma_gather_kernel(idx_smem, table_hbm, out_ref, copy_sem):
    # idx_smem:  (N_pad,) int32 in SMEM (scalar prefetch -- no vector index DMA)
    # table_hbm: (V, D) in HBM (memory_space=pl.ANY), gathered row-by-row via DMA
    # out_ref:   (TN, D) VMEM output tile; row DMAs land here directly
    # copy_sem:  single DMA semaphore shared by this step's row copies
    tn = out_ref.shape[0]
    base = pl.program_id(0) * tn

    def issue(r, carry):
        row = idx_smem[base + r]        # already clipped to [0, V) in the wrapper
        pltpu.make_async_copy(
            table_hbm.at[pl.ds(row, 1), :],
            out_ref.at[pl.ds(r, 1), :],
            copy_sem,
        ).start()
        return carry

    # Unrolled issue loop: DMA descriptor build is scalar-slot bound.
    lax.fori_loop(0, tn, issue, None, unroll=8)

    # Single aggregate wait: the tn row copies together signal tn*D*esize bytes
    # on copy_sem; one descriptor whose dst is the whole (TN, D) tile waits for
    # exactly that total (same trick as the paged-attention multi-page wait).
    # Using out_ref as src+dst also pins the output writeback after this wait.
    pltpu.make_async_copy(out_ref, out_ref, copy_sem).wait()


def _lookup_dma_gather(idx_flat_padded, emb_table, tn):
    n_pad = idx_flat_padded.shape[0]
    v, d = emb_table.shape
    esize = jnp.dtype(emb_table.dtype).itemsize
    n_steps = n_pad // tn

    cost = pl.CostEstimate(
        flops=0,
        transcendentals=0,
        bytes_accessed=2 * n_pad * d * esize + n_pad * 4,   # gather reads + writes
    )

    return pl.pallas_call(
        _dma_gather_kernel,
        out_shape=jax.ShapeDtypeStruct((n_pad, d), emb_table.dtype),
        grid_spec=pltpu.PrefetchScalarGridSpec(
            num_scalar_prefetch=1,                          # indices -> SMEM
            grid=(n_steps,),
            in_specs=[pl.BlockSpec(memory_space=pl.ANY)],   # table stays in HBM
            out_specs=pl.BlockSpec((tn, d), lambda i, idx: (i, 0)),
            scratch_shapes=[pltpu.SemaphoreType.DMA(())],
        ),
        compiler_params=pltpu.CompilerParams(
            # "parallel" lets megacore parts (v7x) shard row tiles across TCs,
            # roughly doubling aggregate DMA issue rate.
            dimension_semantics=("parallel",),
        ),
        cost_estimate=cost,
    )(idx_flat_padded, emb_table)


# ---------------------------------------------------------------------------
# Wrapper: PrecomputedFixedEmbeddings.forward
# ---------------------------------------------------------------------------
def precomputed_fixed_embeddings(article_indices, emb_table, *,
                                 tile_rows_matmul=512, tile_rows_gather=512):
    """Frozen embedding lookup: emb_table[article_indices].

    article_indices: int array of arbitrary shape, values in [0, V)
    emb_table:       [V, D] float table of precomputed article embeddings
    returns:         article_indices.shape + (D,) array, dtype of emb_table
    """
    v, d = emb_table.shape
    orig_shape = article_indices.shape
    flat_idx = article_indices.reshape(-1).astype(jnp.int32)
    # Clip hoisted out of the kernels (done once in XLA, keeps DMAs in-bounds).
    flat_idx = jnp.clip(flat_idx, 0, v - 1)
    n = max(int(flat_idx.shape[0]), 1)

    budget = _vmem_budget_bytes()
    esize = jnp.dtype(emb_table.dtype).itemsize

    # Candidate MXU-path row tile: big multiple of 8 (ideally of 256) so each
    # step fills the MXU M dimension; clamped for tiny problems.
    tn_a = min(_round_up(tile_rows_matmul, 8), _round_up(n, 8))

    # MXU-path VMEM footprint: pipeline-buffered table & tiles plus in-kernel
    # intermediates (iota, compare mask, cast one-hot, f32 matmul result).
    vmem_need_a = (
        2 * v * d * esize                   # resident table (2x pipeline bufs)
        + 2 * tn_a * 128 * 4                # (TN,1) idx tiles (lane-padded)
        + 2 * tn_a * d * esize              # output tiles
        + tn_a * v * (4 + 4 + esize)        # iota + mask + one-hot
        + tn_a * d * 4                      # f32 accumulator before cast
    )

    use_mxu = (
        jnp.issubdtype(emb_table.dtype, jnp.floating)
        and esize >= 2                       # guard fp8/int tables off the MXU path
        and vmem_need_a <= budget
    )

    tn = tn_a if use_mxu else min(_round_up(tile_rows_gather, 8), _round_up(n, 8))
    n_pad = _round_up(n, tn)
    if n_pad != flat_idx.shape[0]:
        # Padded rows look up row 0 and are sliced off below.
        flat_idx = jnp.pad(flat_idx, (0, n_pad - flat_idx.shape[0]))

    if use_mxu:
        out = _lookup_onehot(flat_idx, emb_table, tn, budget)
    else:
        out = _lookup_dma_gather(flat_idx, emb_table, tn)

    return out[:n].reshape(orig_shape + (d,))


if __name__ == "__main__":
    key = jax.random.PRNGKey(0)
    k1, k2, k3, k4 = jax.random.split(key, 4)

    # Case 1: small precomputed catalog -> VMEM-resident one-hot MXU path.
    V1, D1 = 16, 128
    table1 = jax.random.normal(k1, (V1, D1), dtype=jnp.float32)
    idx1 = jax.random.randint(k2, (2, 8), 0, V1, dtype=jnp.int32)   # clicked-article ids
    out1 = jax.block_until_ready(precomputed_fixed_embeddings(idx1, table1))
    ref1 = table1[idx1]
    assert out1.shape == (2, 8, D1), out1.shape
    assert jnp.allclose(out1, ref1, atol=1e-6), "mismatch on one-hot matmul path"

    # Case 2: large catalog (table + one-hot working set exceeds any VMEM budget)
    # -> scalar-prefetch DMA row-gather path (N=600 pads to 1024 -> 2 steps of 512).
    V2, D2 = 16384, 128
    table2 = jax.random.normal(k3, (V2, D2), dtype=jnp.float32)
    idx2 = jax.random.randint(k4, (3, 200), 0, V2, dtype=jnp.int32)
    out2 = jax.block_until_ready(precomputed_fixed_embeddings(idx2, table2))
    ref2 = table2[idx2]
    assert out2.shape == (3, 200, D2), out2.shape
    assert jnp.allclose(out2, ref2, atol=1e-6), "mismatch on DMA gather path"

    # TODO(synk): freeze=True only affects training (stop-gradient); forward is identical.
    print("KERNEL_OK")
</pallas_src>

<mosaic_0001>
module attributes {stable_mosaic.version = 11 : i64} {
  func.func @_onehot_matmul_kernel(%arg0: i32, %arg1: memref<16x1xi32, #tpu.memory_space<vmem>>, %arg2: memref<16x128xf32, #tpu.memory_space<vmem>>, %arg3: memref<16x128xf32, #tpu.memory_space<vmem>>) attributes {dimension_semantics = [#tpu.dimension_semantics<parallel>], iteration_bounds = array<i64: 1>, scalar_prefetch = 0 : i64, scratch_operands = 0 : i64, tpu.core_type = #tpu.core_type<tc>, window_params = [{transform_indices = @transform_0, window_bounds = array<i64: 16, 1>}, {pipeline_mode = #tpu.pipeline_mode<synchronous>, transform_indices = @transform_1, window_bounds = array<i64: 16, 128>}, {transform_indices = @transform_2, window_bounds = array<i64: 16, 128>}]} {
    %c0 = arith.constant 0 : index
    %c0_0 = arith.constant 0 : index
    %0 = vector.load %arg1[%c0, %c0_0] : memref<16x1xi32, #tpu.memory_space<vmem>>, vector<16x1xi32>
    %1 = tpu.iota {dimensions = array<i32: 1>} : vector<16x16xi32>
    %2 = vector.broadcast %0 : vector<16x1xi32> to vector<16x16xi32>
    %3 = arith.cmpi eq, %2, %1 : vector<16x16xi32>
    %4 = arith.extui %3 : vector<16x16xi1> to vector<16x16xi32>
    %5 = arith.sitofp %4 : vector<16x16xi32> to vector<16x16xf32>
    %c0_1 = arith.constant 0 : index
    %c0_2 = arith.constant 0 : index
    %6 = vector.load %arg2[%c0_1, %c0_2] : memref<16x128xf32, #tpu.memory_space<vmem>>, vector<16x128xf32>
    %cst = arith.constant dense<0.000000e+00> : vector<16x128xf32>
    %7 = tpu.matmul %5, %6, %cst {dimension_numbers = #tpu.dot_dimension_numbers<[1], [0], [0], [1], [0, 0, 1, 1], [], []>} : vector<16x16xf32>, vector<16x128xf32>, vector<16x128xf32> -> vector<16x128xf32>
    %c0_3 = arith.constant 0 : index
    %c0_4 = arith.constant 0 : index
    %8 = vector.load %arg3[%c0_3, %c0_4] : memref<16x128xf32, #tpu.memory_space<vmem>>, vector<16x128xf32>
    tpu.vector_store %arg3[%c0_3, %c0_4], %7 {strides = array<i32>} : memref<16x128xf32, #tpu.memory_space<vmem>>, vector<16x128xf32>,
    return
  }
  func.func @transform_0(%arg0: i32) -> (i32, i32) {
    %c0_i32 = arith.constant 0 : i32
    %c0_i32_0 = arith.constant 0 : i32
    return %arg0, %c0_i32 : i32, i32
  }
  func.func @transform_1(%arg0: i32) -> (i32, i32) {
    %c0_i32 = arith.constant 0 : i32
    %c0_i32_0 = arith.constant 0 : i32
    %c0_i32_1 = arith.constant 0 : i32
    return %c0_i32, %c0_i32_0 : i32, i32
  }
  func.func @transform_2(%arg0: i32) -> (i32, i32) {
    %c0_i32 = arith.constant 0 : i32
    %c0_i32_0 = arith.constant 0 : i32
    return %arg0, %c0_i32 : i32, i32
  }
}

</mosaic_0001>

<llo_original>
// kernel: tpu_custom_call.1
$region0: #{tpu_custom_call.1}
  #allocation0 [shape = 'u32[]', space=smem, size = 0x4, offset = 0x4, fixed_abs, tag = 'smem constant byte address 0x4 - core index']
  #allocation1 [shape = 'u32[72,128]{1,0:T(1,128)}', space=vmem, size = 0x9000, scoped, tag = 'internal scratch']
  %s0 = inlined_call_operand.vmem [shape: s32[16,1], index: 0, kind: input, shape index: {}]
  %s1 = inlined_call_operand.vmem [shape: f32[16,128], index: 1, kind: input, shape index: {}]
  %s2 = inlined_call_operand.hbm [shape: f32[16,128], index: 2, kind: output, shape index: {}]
  %s3 = sld [smem:[#allocation0]]
  $region18: #{tpu_custom_call.1} parent=0
    _
  %s5 = ssub.s32 1, %s3
  %s6 = scalar_select 0, %s5, %s3
  $region1: #{tpu_custom_call.1} parent=0
    #allocation2 [shape = 'u8[8192]{0}', space=vmem, size = 0x2000, scoped, tag = 'output window, operand 0, single buffered']
    #allocation3 [shape = 's32[1]{0}', space=sflag, size = 0x4, scoped, tag = 'scoped memory for tpu_custom_call.1']
    %7 = vsyncpa [#allocation3], 0
    // Predicated region
    $region2: #{tpu_custom_call.1} parent=1 // pred_check
      _
    $region3: #{tpu_custom_call.1} parent=1 // pred_check_branch
      %9 = sbr.rel (0) target = $region5
    $region4: #{tpu_custom_call.1} parent=1 // pred_region
      _
    $region5: #{tpu_custom_call.1} parent=1 // pred_fallthru
      _
    // Predicated region
    $region6: #{tpu_custom_call.1} parent=1 // pred_check
      _
    $region7: #{tpu_custom_call.1} parent=1 // pred_check_branch
      %11 = sbr.rel (0) target = $region9
    $region8: #{tpu_custom_call.1} parent=1 // pred_region
      _
    $region9: #{tpu_custom_call.1} parent=1 // pred_fallthru
      _
    %v12 = vld [vmem:[%s0] sm:$0xff]
    %v13 = vld [vmem:[%s0 + $0x8] sm:$0xff]
    %v14 = vlaneseq
    %v15 = vand.u32 %v14, 127
    %16 = vset.pattern.permute.xlu0 0
    %17 = vperm.xlu0 %16, %v12
    %v18 = vpop.permute.xlu0 %17
    %19 = vset.pattern.permute.xlu0 0
    %20 = vperm.xlu0 %19, %v13
    %v21 = vpop.permute.xlu0 %20
    %vm22 = vcmp.eq.s32.totalorder %v18, %v15
    %vm23 = vcmp.eq.s32.totalorder %v21, %v15
    %v24 = vsel %vm22, 1, 0
    %v25 = vsel %vm23, 1, 0
    %v26 = vcvt.s32.f32 %v24
    %v27 = vcvt.s32.f32 %v25
    %v28 = vld [vmem:[%s1] sm:$0xff]
    %v29 = vld [vmem:[%s1 + $0x8] sm:$0xff]
    %vm30 = vcmask 130048
    %v32 = vsel %vm30, %v26, 0
    %v35 = vsel %vm30, %v27, 0
    %37 = vmatpush.msra.mxu0 0.0
    %38 = vmatpush.msra.mxu0 0.0
    %39 = vmatpush.msra.mxu0 0.0
    %40 = vmatpush.msra.mxu0 0.0
    %41 = vmatpush.msra.mxu0 0.0
    %42 = vmatpush.msra.mxu0 0.0
    %43 = vmatpush.msra.mxu0 0.0
    %44 = vmatpush.msra.mxu0 0.0
    %45 = vmatpush.msra.mxu0 0.0
    %46 = vmatpush.msra.mxu0 0.0
    %47 = vmatpush.msra.mxu0 0.0
    %48 = vmatpush.msra.mxu0 0.0
    %49 = vmatpush.msra.mxu0 0.0
    %50 = vmatpush.msra.mxu0 0.0
    %51 = vmatpush.msra.mxu0 %v29
    %52 = vmatpush.msra.mxu0 %v28
    %53 = vmatmul.f32.gmra.mxu0 %v32
    %v54 = vpop.f32.mrf.mxu0
    %v55 = vadd.f32 0.0, %v54
    %56 = vmatmul.f32.gmra.mxu0 %v35
    %v57 = vpop.f32.mrf.mxu0
    %v58 = vadd.f32 0.0, %v57
    %59 = vdwg.mxu0
    %60 = vst [vmem:[#allocation2] sm:$0xff] %v55
    %61 = vst [vmem:[#allocation2 + $0x8] sm:$0xff] %v58
    // Predicated region
    $region10: #{tpu_custom_call.1} parent=1 // pred_check
      _
    $region11: #{tpu_custom_call.1} parent=1 // pred_check_branch
      %63 = sbr.rel (0) target = $region13
    $region12: #{tpu_custom_call.1} parent=1 // pred_region
      %65 = vsyncadd [#allocation3], 0
      %s66 = sshll.u32 [#allocation2], 4
      %s67 = int_to_ptr.vmem [resolvable:$true] %s66
      %s68 = sshll.u32 %s2, 4
      %s69 = int_to_ptr.hbm [resolvable:$true] %s68
      %74 = dma.vmem_to_hbm [thread:$0]  %s67, 256, %s69, [#allocation3], 128, 128, 8
    $region13: #{tpu_custom_call.1} parent=1 // pred_fallthru
      _
    // Predicated region
    $region14: #{tpu_custom_call.1} parent=1 // pred_check
      _
    $region15: #{tpu_custom_call.1} parent=1 // pred_check_branch
      %76 = sbr.rel (0) target = $region17
    $region16: #{tpu_custom_call.1} parent=1 // pred_region
      %78 = dma.done [#allocation3], 256
    $region17: #{tpu_custom_call.1} parent=1 // pred_fallthru
      _
    %79 = vsyncpa [#allocation3], 1

</llo_original>
